<compile_context>
chip_gen: v7x
topology: tpu7x:2x2x1
jax: 0.10.0
libtpu: 0.0.40
codegen_flags: <defaults>
</compile_context>

<pallas_src>
import functools

import numpy as np
import jax
import jax.numpy as jnp
from jax.experimental import pallas as pl
from jax.experimental.pallas import tpu as pltpu

WIN_SIZE = 11
WIN_SIGMA = 1.5
DATA_RANGE = 1.0
C1 = (0.01 * DATA_RANGE) ** 2
C2 = (0.03 * DATA_RANGE) ** 2
_NUM_MAPS = 5            # x, y, x*x, y*y, x*y
_LANE = 128
_SUBLANE = 8


def _round_up(x, m):
    return ((x + m - 1) // m) * m


def _gauss_window(size, sigma):
    coords = np.arange(size, dtype=np.float64) - size // 2
    g = np.exp(-(coords ** 2) / (2.0 * sigma ** 2))
    g /= g.sum()
    return g.astype(np.float32)


def _packed_kw(w, p, win, lvp):
    """(P*W, Lvp) block-diagonal horizontal valid-conv filter.

    Image q (input cols [q*W, (q+1)*W)) maps to output cols [q*Wv, (q+1)*Wv);
    output columns >= P*Wv are zero (lane padding, masked in-kernel)."""
    k = len(win)
    wv = w - k + 1
    m = np.zeros((p * w, lvp), np.float32)
    for q in range(p):
        for j in range(wv):
            m[q * w + j:q * w + j + k, q * wv + j] = win
    return m


def _kh_single(h, hp, hv, hvp, win):
    """(Hvp, Hp) vertical valid-conv filter; padded rows/cols are zero."""
    del h
    k = len(win)
    m = np.zeros((hvp, hp), np.float32)
    for i in range(hv):
        m[i, i:i + k] = win
    return m


def _choose_pack(nc, w):
    """Lane-pack factor P: largest divisor of NC with P*W <= 128 (>= 1)."""
    if w >= _LANE:
        return 1
    best = 1
    for p in range(1, min(nc, max(1, _LANE // w)) + 1):
        if nc % p == 0 and p * w <= _LANE:
            best = p
    return best


def _vmem_bytes(gb, hp, l, lvp, hvp, in_item, c_item):
    """Rough per-step VMEM working-set estimate (bytes)."""
    blk_in = gb * hp * l * in_item                       # one input block
    maps_f32 = _NUM_MAPS * gb * hp * l * 4
    maps_c = _NUM_MAPS * gb * hp * l * c_item if c_item != 4 else 0
    t_f32 = _NUM_MAPS * gb * hp * lvp * 4
    t_c = _NUM_MAPS * gb * hp * lvp * c_item if c_item != 4 else 0
    v_f32 = _NUM_MAPS * gb * hvp * lvp * 4
    elem = 8 * gb * hvp * lvp * 4                        # SSIM elementwise temps
    kw = l * lvp * c_item
    khb = (_NUM_MAPS * gb * hvp) * (_NUM_MAPS * gb * hp) * c_item
    out = 2 * _LANE * 4
    return 2 * 2 * blk_in + maps_f32 + maps_c + t_f32 + t_c + v_f32 + elem + kw + khb + out


def _choose_group_block(g, hp, l, lvp, hvp, in_item, c_item):
    """Groups per grid step: amortize per-step overhead, bounded by VMEM."""
    best = 1
    for gb in range(1, min(g, 32) + 1):
        if g % gb:
            continue
        blk = gb * hp * l * in_item
        khb = (_NUM_MAPS * gb * hvp) * (_NUM_MAPS * gb * hp) * c_item
        est = _vmem_bytes(gb, hp, l, lvp, hvp, in_item, c_item)
        if blk <= (1 << 20) and khb <= (4 << 20) and est <= (18 << 20):
            best = gb
    return best


def _diffusion_loss_kernel(kw_ref, kh_ref, pred_ref, targ_ref, out_ref, *,
                           gb, hp, hvp, hv, l, lv, compute_dtype):
    # (Gb, Hp, L) -> (Gb*Hp, L); free reshape since Hp % 8 == 0.
    x = pred_ref[...].astype(jnp.float32).reshape(gb * hp, l)
    y = targ_ref[...].astype(jnp.float32).reshape(gb * hp, l)

    # L1 partial sum (padded rows are zero in both inputs -> contribute 0).
    l1_sum = jnp.sum(jnp.abs(x - y))

    # Five SSIM maps stacked along sublanes, map-major: (5*Gb*Hp, L).
    maps = jnp.concatenate([x, y, x * x, y * y, x * y], axis=0)
    maps = maps.astype(compute_dtype)

    # Horizontal valid conv: ONE MXU matmul with the block-diag (L, Lvp) filter.
    t = jnp.dot(maps, kw_ref[...], preferred_element_type=jnp.float32)

    # Vertical valid conv: ONE MXU matmul with the (5*Gb*Hvp, 5*Gb*Hp)
    # block-diagonal filter, fused across the 5 maps and the Gb groups.
    v = jnp.dot(kh_ref[...], t.astype(compute_dtype),
                preferred_element_type=jnp.float32)

    seg = gb * hvp                     # rows per map (multiple of 8 -> free views)
    mu1 = v[0 * seg:1 * seg]
    mu2 = v[1 * seg:2 * seg]
    exx = v[2 * seg:3 * seg]
    eyy = v[3 * seg:4 * seg]
    exy = v[4 * seg:5 * seg]

    mu1_sq = mu1 * mu1
    mu2_sq = mu2 * mu2
    mu1_mu2 = mu1 * mu2
    sigma1_sq = exx - mu1_sq
    sigma2_sq = eyy - mu2_sq
    sigma12 = exy - mu1_mu2

    # Two SSIM divides folded into one; divide on the EUP (approx recip +
    # one Newton step -> ~1e-7 relative error, well inside the 2e-5 tolerance).
    num = (2.0 * mu1_mu2 + C1) * (2.0 * sigma12 + C2)
    den = (mu1_sq + mu2_sq + C1) * (sigma1_sq + sigma2_sq + C2)
    r = pl.reciprocal(den, approx=True)
    r = r * (2.0 - den * r)
    ssim_map = num * r

    # Mask padded rows (Hv..Hvp-1 of each segment) and padded lanes (>= Lv),
    # which would otherwise evaluate to ssim == 1 and bias the mean.
    rows = jax.lax.broadcasted_iota(jnp.int32, ssim_map.shape, 0)
    lanes = jax.lax.broadcasted_iota(jnp.int32, ssim_map.shape, 1)
    valid = ((rows % hvp) < hv) & (lanes < lv)
    ssim_sum = jnp.sum(jnp.where(valid, ssim_map, 0.0))

    # Single lane-dense (1,128) output: lane 0 = L1 partial, lane 1 = SSIM partial.
    lane_id = jax.lax.broadcasted_iota(jnp.int32, (1, _LANE), 1)
    out_ref[0] = (jnp.where(lane_id == 0, l1_sum, 0.0) +
                  jnp.where(lane_id == 1, ssim_sum, 0.0))


def diffusion_loss(predicted, target, ssim_weight=0.1):
    """Pallas implementation of DiffusionLoss.forward. Inputs are NCHW."""
    N, C, H, W = predicted.shape
    NC = N * C
    assert H >= WIN_SIZE and W >= WIN_SIZE, "spatial dims must be >= 11 for SSIM"

    Hv, Wv = H - WIN_SIZE + 1, W - WIN_SIZE + 1
    in_dtype = predicted.dtype
    in_item = jnp.dtype(in_dtype).itemsize
    compute_dtype = jnp.bfloat16 if in_dtype == jnp.bfloat16 else jnp.float32
    c_item = jnp.dtype(compute_dtype).itemsize

    # Lane packing: P images side-by-side along lanes, capped at P*W ~ 128.
    P = _choose_pack(NC, W)
    G = NC // P
    L = P * W
    Lv = P * Wv
    Lvp = _round_up(Lv, _LANE)         # lane-aligned conv output (padding masked)
    Hp = _round_up(H, _SUBLANE)
    Hvp = _round_up(Hv, _SUBLANE)

    x = predicted.reshape(NC, H, W)
    y = target.reshape(NC, H, W)
    if P > 1:
        # TODO(synk): on v5e, do this (P,H,W)->(H,P*W) shuffle in-kernel (XLU is
        # idle here) to avoid an extra HBM pass; only taken when W < 128.
        x = x.reshape(G, P, H, W).transpose(0, 2, 1, 3).reshape(G, H, L)
        y = y.reshape(G, P, H, W).transpose(0, 2, 1, 3).reshape(G, H, L)
    else:
        x = x.reshape(G, H, L)
        y = y.reshape(G, H, L)
    if Hp != H:
        x = jnp.pad(x, ((0, 0), (0, Hp - H), (0, 0)))
        y = jnp.pad(y, ((0, 0), (0, Hp - H), (0, 0)))

    # Multiple lane-packed groups per grid step.
    Gb = _choose_group_block(G, Hp, L, Lvp, Hvp, in_item, c_item)
    NB = G // Gb

    win = _gauss_window(WIN_SIZE, WIN_SIGMA)
    kw = jnp.asarray(_packed_kw(W, P, win, Lvp), dtype=compute_dtype)
    kh1 = _kh_single(H, Hp, Hv, Hvp, win)
    kh_big = jnp.asarray(
        np.kron(np.eye(_NUM_MAPS * Gb, dtype=np.float32), kh1), dtype=compute_dtype)

    # TODO(synk): for very large frames (H,W >~ 512 on v7x) add a halo-tiled
    # second grid axis over H instead of holding the full group in VMEM.
    vmem_est = _vmem_bytes(Gb, Hp, L, Lvp, Hvp, in_item, c_item)
    vmem_limit = int(min(40 << 20, max(32 << 20, 2 * vmem_est)))

    kernel = functools.partial(
        _diffusion_loss_kernel, gb=Gb, hp=Hp, hvp=Hvp, hv=Hv, l=L, lv=Lv,
        compute_dtype=compute_dtype)

    parts = pl.pallas_call(
        kernel,
        out_shape=jax.ShapeDtypeStruct((NB, 1, _LANE), jnp.float32),
        grid_spec=pltpu.PrefetchScalarGridSpec(
            num_scalar_prefetch=0,
            grid=(NB,),
            in_specs=[
                pl.BlockSpec((L, Lvp), lambda i: (0, 0)),              # Kw (resident)
                pl.BlockSpec((_NUM_MAPS * Gb * Hvp, _NUM_MAPS * Gb * Hp),
                             lambda i: (0, 0)),                        # Kh_big (resident)
                pl.BlockSpec((Gb, Hp, L), lambda i: (i, 0, 0)),        # pred block
                pl.BlockSpec((Gb, Hp, L), lambda i: (i, 0, 0)),        # target block
            ],
            out_specs=pl.BlockSpec((1, 1, _LANE), lambda i: (i, 0, 0)),
        ),
        compiler_params=pltpu.CompilerParams(
            dimension_semantics=("parallel",),        # megacore-splittable (v7x)
            vmem_limit_bytes=vmem_limit),
    )(kw, kh_big, x, y)

    # Tiny final reduction + weighting in plain JAX (keeps the grid parallel).
    l1_mean = jnp.sum(parts[:, 0, 0]) / float(NC * H * W)
    ssim_mean = jnp.sum(parts[:, 0, 1]) / float(NC * Hv * Wv)
    return l1_mean + ssim_weight * (1.0 - ssim_mean)


def _reference_loss(predicted, target, ssim_weight=0.1):
    """Pure-JAX reference mirroring pytorch_msssim ssim + F.l1_loss."""
    win = jnp.asarray(_gauss_window(WIN_SIZE, WIN_SIGMA))
    N, C, H, W = predicted.shape
    Hv, Wv = H - WIN_SIZE + 1, W - WIN_SIZE + 1
    x = predicted.reshape(N * C, H, W).astype(jnp.float32)
    y = target.reshape(N * C, H, W).astype(jnp.float32)

    def gfilter(a):  # (B, H, W) -> (B, Hv, Wv) separable valid conv
        tmp = sum(win[k] * a[:, :, k:k + Wv] for k in range(WIN_SIZE))
        out = sum(win[k] * tmp[:, k:k + Hv, :] for k in range(WIN_SIZE))
        return out

    mu1, mu2 = gfilter(x), gfilter(y)
    mu1_sq, mu2_sq, mu1_mu2 = mu1 * mu1, mu2 * mu2, mu1 * mu2
    sigma1_sq = gfilter(x * x) - mu1_sq
    sigma2_sq = gfilter(y * y) - mu2_sq
    sigma12 = gfilter(x * y) - mu1_mu2
    cs = (2 * sigma12 + C2) / (sigma1_sq + sigma2_sq + C2)
    ssim_map = ((2 * mu1_mu2 + C1) / (mu1_sq + mu2_sq + C1)) * cs
    ssim_val = jnp.mean(ssim_map)
    l1 = jnp.mean(jnp.abs(x - y))
    return l1 + ssim_weight * (1.0 - ssim_val)


if __name__ == "__main__":
    key = jax.random.PRNGKey(0)
    k1, k2 = jax.random.split(key)
    N, C, H, W = 2, 4, 16, 16
    predicted = jax.random.uniform(k1, (N, C, H, W), dtype=jnp.float32)
    target = jax.random.uniform(k2, (N, C, H, W), dtype=jnp.float32)

    loss_fn = jax.jit(functools.partial(diffusion_loss, ssim_weight=0.1))
    loss = jax.block_until_ready(loss_fn(predicted, target))

    ref = jax.block_until_ready(_reference_loss(predicted, target, ssim_weight=0.1))
    assert np.allclose(np.asarray(loss), np.asarray(ref), atol=2e-5, rtol=2e-5), (
        f"mismatch: pallas={loss} ref={ref}")

    print("KERNEL_OK")
</pallas_src>

<mosaic_0001>
module attributes {stable_mosaic.version = 11 : i64} {
  func.func @_diffusion_loss_kernel(%arg0: i32, %arg1: memref<128x128xf32, #tpu.memory_space<vmem>>, %arg2: memref<40x80xf32, #tpu.memory_space<vmem>>, %arg3: memref<1x16x128xf32, #tpu.memory_space<vmem>>, %arg4: memref<1x16x128xf32, #tpu.memory_space<vmem>>, %arg5: memref<1x1x128xf32, #tpu.memory_space<vmem>>) attributes {dimension_semantics = [#tpu.dimension_semantics<parallel>], iteration_bounds = array<i64: 1>, scalar_prefetch = 0 : i64, scratch_operands = 0 : i64, tpu.core_type = #tpu.core_type<tc>, window_params = [{pipeline_mode = #tpu.pipeline_mode<synchronous>, transform_indices = @transform_0, window_bounds = array<i64: 128, 128>}, {pipeline_mode = #tpu.pipeline_mode<synchronous>, transform_indices = @transform_1, window_bounds = array<i64: 40, 80>}, {transform_indices = @transform_2, window_bounds = array<i64: 1, 16, 128>}, {transform_indices = @transform_3, window_bounds = array<i64: 1, 16, 128>}, {transform_indices = @transform_4, window_bounds = array<i64: 1, 1, 128>}]} {
    %c0 = arith.constant 0 : index
    %c0_0 = arith.constant 0 : index
    %c0_1 = arith.constant 0 : index
    %0 = vector.load %arg3[%c0, %c0_0, %c0_1] : memref<1x16x128xf32, #tpu.memory_space<vmem>>, vector<1x16x128xf32>
    %1 = vector.shape_cast %0 : vector<1x16x128xf32> to vector<16x128xf32>
    %c0_2 = arith.constant 0 : index
    %c0_3 = arith.constant 0 : index
    %c0_4 = arith.constant 0 : index
    %2 = vector.load %arg4[%c0_2, %c0_3, %c0_4] : memref<1x16x128xf32, #tpu.memory_space<vmem>>, vector<1x16x128xf32>
    %3 = vector.shape_cast %2 : vector<1x16x128xf32> to vector<16x128xf32>
    %4 = arith.subf %1, %3 : vector<16x128xf32>
    %5 = math.absf %4 : vector<16x128xf32>
    %6 = vector.shape_cast %5 : vector<16x128xf32> to vector<1x16x128xf32>
    %cst = arith.constant dense<0.000000e+00> : vector<1xf32>
    %7 = vector.multi_reduction <add>, %6, %cst [1, 2] : vector<1x16x128xf32> to vector<1xf32>
    %8 = vector.shape_cast %7 : vector<1xf32> to vector<1x1x1xf32>
    %9 = vector.extract %8[0, 0, 0] : f32 from vector<1x1x1xf32>
    %10 = arith.mulf %1, %1 : vector<16x128xf32>
    %11 = arith.mulf %3, %3 : vector<16x128xf32>
    %12 = arith.mulf %1, %3 : vector<16x128xf32>
    %13 = tpu.concatenate %1, %3, %10, %11, %12 in 0 : vector<16x128xf32>, vector<16x128xf32>, vector<16x128xf32>, vector<16x128xf32>, vector<16x128xf32> -> vector<80x128xf32>
    %c0_5 = arith.constant 0 : index
    %c0_6 = arith.constant 0 : index
    %14 = vector.load %arg1[%c0_5, %c0_6] : memref<128x128xf32, #tpu.memory_space<vmem>>, vector<128x128xf32>
    %cst_7 = arith.constant dense<0.000000e+00> : vector<80x128xf32>
    %15 = tpu.matmul %13, %14, %cst_7 {dimension_numbers = #tpu.dot_dimension_numbers<[1], [0], [0], [1], [0, 0, 1, 1], [], []>} : vector<80x128xf32>, vector<128x128xf32>, vector<80x128xf32> -> vector<80x128xf32>
    %c0_8 = arith.constant 0 : index
    %c0_9 = arith.constant 0 : index
    %16 = vector.load %arg2[%c0_8, %c0_9] : memref<40x80xf32, #tpu.memory_space<vmem>>, vector<40x80xf32>
    %cst_10 = arith.constant dense<0.000000e+00> : vector<40x128xf32>
    %17 = tpu.matmul %16, %15, %cst_10 {dimension_numbers = #tpu.dot_dimension_numbers<[1], [0], [0], [1], [0, 0, 1, 1], [], []>} : vector<40x80xf32>, vector<80x128xf32>, vector<40x128xf32> -> vector<40x128xf32>
    %18 = vector.extract_strided_slice %17 {offsets = [0, 0], sizes = [8, 128], strides = [1, 1]} : vector<40x128xf32> to vector<8x128xf32>
    %19 = vector.extract_strided_slice %17 {offsets = [8, 0], sizes = [8, 128], strides = [1, 1]} : vector<40x128xf32> to vector<8x128xf32>
    %20 = vector.extract_strided_slice %17 {offsets = [16, 0], sizes = [8, 128], strides = [1, 1]} : vector<40x128xf32> to vector<8x128xf32>
    %21 = vector.extract_strided_slice %17 {offsets = [24, 0], sizes = [8, 128], strides = [1, 1]} : vector<40x128xf32> to vector<8x128xf32>
    %22 = vector.extract_strided_slice %17 {offsets = [32, 0], sizes = [8, 128], strides = [1, 1]} : vector<40x128xf32> to vector<8x128xf32>
    %23 = arith.mulf %18, %18 : vector<8x128xf32>
    %24 = arith.mulf %19, %19 : vector<8x128xf32>
    %25 = arith.mulf %18, %19 : vector<8x128xf32>
    %26 = arith.subf %20, %23 : vector<8x128xf32>
    %27 = arith.subf %21, %24 : vector<8x128xf32>
    %28 = arith.subf %22, %25 : vector<8x128xf32>
    %cst_11 = arith.constant 2.000000e+00 : f32
    %29 = vector.broadcast %cst_11 : f32 to vector<8x128xf32>
    %30 = arith.mulf %29, %25 : vector<8x128xf32>
    %cst_12 = arith.constant 9.99999974E-5 : f32
    %31 = vector.broadcast %cst_12 : f32 to vector<8x128xf32>
    %32 = arith.addf %30, %31 : vector<8x128xf32>
    %cst_13 = arith.constant 2.000000e+00 : f32
    %33 = vector.broadcast %cst_13 : f32 to vector<8x128xf32>
    %34 = arith.mulf %33, %28 : vector<8x128xf32>
    %cst_14 = arith.constant 8.99999984E-4 : f32
    %35 = vector.broadcast %cst_14 : f32 to vector<8x128xf32>
    %36 = arith.addf %34, %35 : vector<8x128xf32>
    %37 = arith.mulf %32, %36 : vector<8x128xf32>
    %38 = arith.addf %23, %24 : vector<8x128xf32>
    %cst_15 = arith.constant 9.99999974E-5 : f32
    %39 = vector.broadcast %cst_15 : f32 to vector<8x128xf32>
    %40 = arith.addf %38, %39 : vector<8x128xf32>
    %41 = arith.addf %26, %27 : vector<8x128xf32>
    %cst_16 = arith.constant 8.99999984E-4 : f32
    %42 = vector.broadcast %cst_16 : f32 to vector<8x128xf32>
    %43 = arith.addf %41, %42 : vector<8x128xf32>
    %44 = arith.mulf %40, %43 : vector<8x128xf32>
    %45 = tpu.reciprocal %44 {approx = true} : vector<8x128xf32> -> vector<8x128xf32>
    %46 = arith.mulf %44, %45 : vector<8x128xf32>
    %cst_17 = arith.constant 2.000000e+00 : f32
    %47 = vector.broadcast %cst_17 : f32 to vector<8x128xf32>
    %48 = arith.subf %47, %46 : vector<8x128xf32>
    %49 = arith.mulf %45, %48 : vector<8x128xf32>
    %50 = arith.mulf %37, %49 : vector<8x128xf32>
    %51 = tpu.iota {dimensions = array<i32: 0>} : vector<8x128xi32>
    %52 = tpu.iota {dimensions = array<i32: 1>} : vector<8x128xi32>
    %c8_i32 = arith.constant 8 : i32
    %c0_i32 = arith.constant 0 : i32
    %53 = arith.cmpi eq, %c8_i32, %c0_i32 : i32
    %c1_i32 = arith.constant 1 : i32
    %54 = arith.select %53, %c1_i32, %c8_i32 : i32
    %55 = vector.broadcast %54 : i32 to vector<8x128xi32>
    %56 = arith.remsi %51, %55 : vector<8x128xi32>
    %c0_i32_18 = arith.constant 0 : i32
    %57 = vector.broadcast %c0_i32_18 : i32 to vector<8x128xi32>
    %58 = arith.cmpi ne, %56, %57 : vector<8x128xi32>
    %c0_i32_19 = arith.constant 0 : i32
    %59 = vector.broadcast %c0_i32_19 : i32 to vector<8x128xi32>
    %60 = arith.cmpi slt, %56, %59 : vector<8x128xi32>
    %c0_i32_20 = arith.constant 0 : i32
    %61 = arith.cmpi slt, %54, %c0_i32_20 : i32
    %62 = vector.broadcast %61 : i1 to vector<8x128xi1>
    %63 = vector.broadcast %62 : vector<8x128xi1> to vector<8x128xi1>
    %64 = arith.xori %60, %63 : vector<8x128xi1>
    %65 = arith.andi %64, %58 : vector<8x128xi1>
    %66 = vector.broadcast %54 : i32 to vector<8x128xi32>
    %67 = arith.addi %56, %66 : vector<8x128xi32>
    %68 = arith.select %65, %67, %56 : vector<8x128xi1>, vector<8x128xi32>
    %c6_i32 = arith.constant 6 : i32
    %69 = vector.broadcast %c6_i32 : i32 to vector<8x128xi32>
    %70 = arith.cmpi slt, %68, %69 : vector<8x128xi32>
    %c48_i32 = arith.constant 48 : i32
    %71 = vector.broadcast %c48_i32 : i32 to vector<8x128xi32>
    %72 = arith.cmpi slt, %52, %71 : vector<8x128xi32>
    %73 = arith.andi %70, %72 : vector<8x128xi1>
    %cst_21 = arith.constant 0.000000e+00 : f32
    %74 = vector.broadcast %cst_21 : f32 to vector<8x128xf32>
    %75 = arith.select %73, %50, %74 : vector<8x128xi1>, vector<8x128xf32>
    %76 = vector.shape_cast %75 : vector<8x128xf32> to vector<1x8x128xf32>
    %cst_22 = arith.constant dense<0.000000e+00> : vector<1xf32>
    %77 = vector.multi_reduction <add>, %76, %cst_22 [1, 2] : vector<1x8x128xf32> to vector<1xf32>
    %78 = vector.shape_cast %77 : vector<1xf32> to vector<1x1x1xf32>
    %79 = vector.extract %78[0, 0, 0] : f32 from vector<1x1x1xf32>
    %80 = tpu.iota {dimensions = array<i32: 1>} : vector<1x128xi32>
    %c0_i32_23 = arith.constant 0 : i32
    %81 = vector.broadcast %c0_i32_23 : i32 to vector<1x128xi32>
    %82 = arith.cmpi eq, %80, %81 : vector<1x128xi32>
    %cst_24 = arith.constant 0.000000e+00 : f32
    %83 = vector.broadcast %9 : f32 to vector<1x128xf32>
    %84 = vector.broadcast %cst_24 : f32 to vector<1x128xf32>
    %85 = arith.select %82, %83, %84 : vector<1x128xi1>, vector<1x128xf32>
    %c1_i32_25 = arith.constant 1 : i32
    %86 = vector.broadcast %c1_i32_25 : i32 to vector<1x128xi32>
    %87 = arith.cmpi eq, %80, %86 : vector<1x128xi32>
    %cst_26 = arith.constant 0.000000e+00 : f32
    %88 = vector.broadcast %79 : f32 to vector<1x128xf32>
    %89 = vector.broadcast %cst_26 : f32 to vector<1x128xf32>
    %90 = arith.select %87, %88, %89 : vector<1x128xi1>, vector<1x128xf32>
    %91 = arith.addf %85, %90 : vector<1x128xf32>
    %c0_27 = arith.constant 0 : index
    %c0_28 = arith.constant 0 : index
    %c0_29 = arith.constant 0 : index
    %92 = vector.load %arg5[%c0_27, %c0_28, %c0_29] : memref<1x1x128xf32, #tpu.memory_space<vmem>>, vector<1x1x128xf32>
    %93 = vector.shape_cast %92 : vector<1x1x128xf32> to vector<1x128xf32>
    %94 = vector.shape_cast %91 : vector<1x128xf32> to vector<1x1x128xf32>
    tpu.vector_store %arg5[%c0_27, %c0_28, %c0_29], %94 {strides = array<i32>} : memref<1x1x128xf32, #tpu.memory_space<vmem>>, vector<1x1x128xf32>,
    return
  }
  func.func @transform_0(%arg0: i32) -> (i32, i32) {
    %c0_i32 = arith.constant 0 : i32
    %c0_i32_0 = arith.constant 0 : i32
    %c0_i32_1 = arith.constant 0 : i32
    return %c0_i32, %c0_i32_0 : i32, i32
  }
  func.func @transform_1(%arg0: i32) -> (i32, i32) {
    %c0_i32 = arith.constant 0 : i32
    %c0_i32_0 = arith.constant 0 : i32
    %c0_i32_1 = arith.constant 0 : i32
    return %c0_i32, %c0_i32_0 : i32, i32
  }
  func.func @transform_2(%arg0: i32) -> (i32, i32, i32) {
    %c0_i32 = arith.constant 0 : i32
    %c0_i32_0 = arith.constant 0 : i32
    %c0_i32_1 = arith.constant 0 : i32
    return %arg0, %c0_i32, %c0_i32_0 : i32, i32, i32
  }
  func.func @transform_3(%arg0: i32) -> (i32, i32, i32) {
    %c0_i32 = arith.constant 0 : i32
    %c0_i32_0 = arith.constant 0 : i32
    %c0_i32_1 = arith.constant 0 : i32
    return %arg0, %c0_i32, %c0_i32_0 : i32, i32, i32
  }
  func.func @transform_4(%arg0: i32) -> (i32, i32, i32) {
    %c0_i32 = arith.constant 0 : i32
    %c0_i32_0 = arith.constant 0 : i32
    %c0_i32_1 = arith.constant 0 : i32
    return %arg0, %c0_i32, %c0_i32_0 : i32, i32, i32
  }
}

</mosaic_0001>

<llo_original>
// kernel: diffusion_loss.1
$region0: #{diffusion_loss.1}
  #allocation0 [shape = 'u32[]', space=smem, size = 0x4, offset = 0x4, fixed_abs, tag = 'smem constant byte address 0x4 - core index']
  #allocation1 [shape = 'u32[144,128]{1,0:T(1,128)}', space=vmem, size = 0x12000, scoped, tag = 'internal scratch']
  %s0 = inlined_call_operand.vmem [shape: f32[128,128], index: 0, kind: input, shape index: {}]
  %s1 = inlined_call_operand.vmem [shape: f32[40,80], index: 1, kind: input, shape index: {}]
  %s2 = inlined_call_operand.vmem [shape: f32[1,16,128], index: 2, kind: input, shape index: {}]
  %s3 = inlined_call_operand.vmem [shape: f32[1,16,128], index: 3, kind: input, shape index: {}]
  %s4 = inlined_call_operand.vmem [shape: f32[1,1,128], index: 4, kind: output, shape index: {}]
  %s5 = sld [smem:[#allocation0]]
  $region26: #{diffusion_loss.1} parent=0
    _
  %s7 = ssub.s32 1, %s5
  %s8 = scalar_select 0, %s7, %s5
  // Predicated region
  $region2: #{diffusion_loss.1} parent=0 // pred_check
    _
  $region3: #{diffusion_loss.1} parent=0 // pred_check_branch
    %10 = sbr.rel (0) target = $region5
  $region4: #{diffusion_loss.1} parent=0 // pred_region
    _
  $region5: #{diffusion_loss.1} parent=0 // pred_fallthru
    _
  // Predicated region
  $region6: #{diffusion_loss.1} parent=0 // pred_check
    _
  $region7: #{diffusion_loss.1} parent=0 // pred_check_branch
    %12 = sbr.rel (0) target = $region9
  $region8: #{diffusion_loss.1} parent=0 // pred_region
    _
  $region9: #{diffusion_loss.1} parent=0 // pred_fallthru
    _
  // Predicated region
  $region10: #{diffusion_loss.1} parent=0 // pred_check
    _
  $region11: #{diffusion_loss.1} parent=0 // pred_check_branch
    %14 = sbr.rel (0) target = $region13
  $region12: #{diffusion_loss.1} parent=0 // pred_region
    _
  $region13: #{diffusion_loss.1} parent=0 // pred_fallthru
    _
  // Predicated region
  $region14: #{diffusion_loss.1} parent=0 // pred_check
    _
  $region15: #{diffusion_loss.1} parent=0 // pred_check_branch
    %16 = sbr.rel (0) target = $region17
  $region16: #{diffusion_loss.1} parent=0 // pred_region
    _
  $region17: #{diffusion_loss.1} parent=0 // pred_fallthru
    _
  %v17 = vld [vmem:[%s2] sm:$0xff]
  %v18 = vld [vmem:[%s2 + $0x8] sm:$0xff]
  %v19 = vld [vmem:[%s3] sm:$0xff]
  %v20 = vld [vmem:[%s3 + $0x8] sm:$0xff]
  %v21 = vsub.f32 %v17, %v19
  %v22 = vsub.f32 %v18, %v20
  %v23 = vand.u32 2147483647, %v21
  %v24 = vand.u32 2147483647, %v22
  %v25 = vadd.f32 %v23, %v24
  %26 = vadd.xlane.f32.xlu0 %v25
  %v27 = vpop.xlane.xlu0 %26
  %v28 = vrot.slane %v27, 4
  %v29 = vadd.f32 %v27, %v28
  %v30 = vrot.slane %v29, 2
  %v31 = vadd.f32 %v29, %v30
  %v32 = vrot.slane %v31, 1
  %v33 = vadd.f32 %v31, %v32
  %s34 = vtos %v33
  %v35 = vmul.f32 %v17, %v17
  %v36 = vmul.f32 %v18, %v18
  %v37 = vmul.f32 %v19, %v19
  %v38 = vmul.f32 %v20, %v20
  %v39 = vmul.f32 %v17, %v19
  %v40 = vmul.f32 %v18, %v20
  %v41 = vld [vmem:[%s0] sm:$0xff]
  %v42 = vld [vmem:[%s0 + $0x8] sm:$0xff]
  %v43 = vld [vmem:[%s0 + $0x10] sm:$0xff]
  %v44 = vld [vmem:[%s0 + $0x18] sm:$0xff]
  %v45 = vld [vmem:[%s0 + $0x20] sm:$0xff]
  %v46 = vld [vmem:[%s0 + $0x28] sm:$0xff]
  %v47 = vld [vmem:[%s0 + $0x30] sm:$0xff]
  %v48 = vld [vmem:[%s0 + $0x38] sm:$0xff]
  %v49 = vld [vmem:[%s0 + $0x40] sm:$0xff]
  %v50 = vld [vmem:[%s0 + $0x48] sm:$0xff]
  %v51 = vld [vmem:[%s0 + $0x50] sm:$0xff]
  %v52 = vld [vmem:[%s0 + $0x58] sm:$0xff]
  %v53 = vld [vmem:[%s0 + $0x60] sm:$0xff]
  %v54 = vld [vmem:[%s0 + $0x68] sm:$0xff]
  %v55 = vld [vmem:[%s0 + $0x70] sm:$0xff]
  %v56 = vld [vmem:[%s0 + $0x78] sm:$0xff]
  %57 = vmatprep.subr.mxu0 0.0
  %58 = vmatpush1.msra.mxu0 %v41
  %59 = vmatprep.subr.mxu0 0.0
  %60 = vmatpush1.msra.mxu0 %v42
  %61 = vmatprep.subr.mxu0 0.0
  %62 = vmatpush1.msra.mxu0 %v43
  %63 = vmatprep.subr.mxu0 0.0
  %64 = vmatpush1.msra.mxu0 %v44
  %65 = vmatprep.subr.mxu0 0.0
  %66 = vmatpush1.msra.mxu0 %v45
  %67 = vmatprep.subr.mxu0 0.0
  %68 = vmatpush1.msra.mxu0 %v46
  %69 = vmatprep.subr.mxu0 0.0
  %70 = vmatpush1.msra.mxu0 %v47
  %71 = vmatprep.subr.mxu0 0.0
  %72 = vmatpush1.msra.mxu0 %v48
  %73 = vmatprep.subr.mxu0 0.0
  %74 = vmatpush1.msra.mxu0 %v49
  %75 = vmatprep.subr.mxu0 0.0
  %76 = vmatpush1.msra.mxu0 %v50
  %77 = vmatprep.subr.mxu0 0.0
  %78 = vmatpush1.msra.mxu0 %v51
  %79 = vmatprep.subr.mxu0 0.0
  %80 = vmatpush1.msra.mxu0 %v52
  %81 = vmatprep.subr.mxu0 0.0
  %82 = vmatpush1.msra.mxu0 %v53
  %83 = vmatprep.subr.mxu0 0.0
  %84 = vmatpush1.msra.mxu0 %v54
  %85 = vmatprep.subr.mxu0 0.0
  %86 = vmatpush1.msra.mxu0 %v55
  %87 = vmatprep.subr.mxu0 0.0
  %88 = vmatpush1.msra.mxu0 %v56
  %89 = vmatprep.subr.mxu0 0.0
  %90 = vmatpush1.msra.mxu0 0.0
  %91 = vmatprep.subr.mxu0 0.0
  %92 = vmatpush1.msra.mxu0 0.0
  %93 = vmatprep.subr.mxu0 0.0
  %94 = vmatpush1.msra.mxu0 0.0
  %95 = vmatprep.subr.mxu0 0.0
  %96 = vmatpush1.msra.mxu0 0.0
  %97 = vmatprep.subr.mxu0 0.0
  %98 = vmatpush1.msra.mxu0 0.0
  %99 = vmatprep.subr.mxu0 0.0
  %100 = vmatpush1.msra.mxu0 0.0
  %101 = vmatprep.subr.mxu0 0.0
  %102 = vmatpush1.msra.mxu0 0.0
  %103 = vmatprep.subr.mxu0 0.0
  %104 = vmatpush1.msra.mxu0 0.0
  %105 = vmatprep.subr.mxu0 0.0
  %106 = vmatpush1.msra.mxu0 0.0
  %107 = vmatprep.subr.mxu0 0.0
  %108 = vmatpush1.msra.mxu0 0.0
  %109 = vmatprep.subr.mxu0 0.0
  %110 = vmatpush1.msra.mxu0 0.0
  %111 = vmatprep.subr.mxu0 0.0
  %112 = vmatpush1.msra.mxu0 0.0
  %113 = vmatprep.subr.mxu0 0.0
  %114 = vmatpush1.msra.mxu0 0.0
  %115 = vmatprep.subr.mxu0 0.0
  %116 = vmatpush1.msra.mxu0 0.0
  %117 = vmatprep.subr.mxu0 0.0
  %118 = vmatpush1.msra.mxu0 0.0
  %119 = vmatprep.subr.mxu0 0.0
  %120 = vmatpush1.msra.mxu0 0.0
  %121 = vmatprep.mubr.f32.mxu0 0.0
  %122 = vmatmul.mubr.f32.gmra.mrb[0].mxu0 %v17
  %v123 = vpop.f32.mrb[0].mxu0
  %v124 = vadd.f32 0.0, %v123
  %v125 = vpop.f32.mrb[0].mxu0
  %126 = vmatprep.mubr.f32.mxu0 0.0
  %127 = vmatmul.mubr.f32.gmra.mrb[0].mxu0 %v18
  %v128 = vpop.f32.mrb[0].mxu0
  %v129 = vadd.f32 0.0, %v128
  %v130 = vpop.f32.mrb[0].mxu0
  %131 = vmatprep.mubr.f32.mxu0 0.0
  %132 = vmatmul.mubr.f32.gmra.mrb[0].mxu0 %v19
  %v133 = vpop.f32.mrb[0].mxu0
  %v134 = vadd.f32 0.0, %v133
  %v135 = vpop.f32.mrb[0].mxu0
  %136 = vmatprep.mubr.f32.mxu0 0.0
  %137 = vmatmul.mubr.f32.gmra.mrb[0].mxu0 %v20
  %v138 = vpop.f32.mrb[0].mxu0
  %v139 = vadd.f32 0.0, %v138
  %v140 = vpop.f32.mrb[0].mxu0
  %141 = vmatprep.mubr.f32.mxu0 0.0
  %142 = vmatmul.mubr.f32.gmra.mrb[0].mxu0 %v35
  %v143 = vpop.f32.mrb[0].mxu0
  %v144 = vadd.f32 0.0, %v143
  %v145 = vpop.f32.mrb[0].mxu0
  %146 = vmatprep.mubr.f32.mxu0 0.0
  %147 = vmatmul.mubr.f32.gmra.mrb[0].mxu0 %v36
  %v148 = vpop.f32.mrb[0].mxu0
  %v149 = vadd.f32 0.0, %v148
  %v150 = vpop.f32.mrb[0].mxu0
  %151 = vmatprep.mubr.f32.mxu0 0.0
  %152 = vmatmul.mubr.f32.gmra.mrb[0].mxu0 %v37
  %v153 = vpop.f32.mrb[0].mxu0
  %v154 = vadd.f32 0.0, %v153
  %v155 = vpop.f32.mrb[0].mxu0
  %156 = vmatprep.mubr.f32.mxu0 0.0
  %157 = vmatmul.mubr.f32.gmra.mrb[0].mxu0 %v38
  %v158 = vpop.f32.mrb[0].mxu0
  %v159 = vadd.f32 0.0, %v158
  %v160 = vpop.f32.mrb[0].mxu0
  %161 = vmatprep.mubr.f32.mxu0 0.0
  %162 = vmatmul.mubr.f32.gmra.mrb[0].mxu0 %v39
  %v163 = vpop.f32.mrb[0].mxu0
  %v164 = vadd.f32 0.0, %v163
  %v165 = vpop.f32.mrb[0].mxu0
  %166 = vmatprep.mubr.f32.mxu0 0.0
  %167 = vmatmul.mubr.f32.gmra.mrb[0].mxu0 %v40
  %v168 = vpop.f32.mrb[0].mxu0
  %v169 = vadd.f32 0.0, %v168
  %v170 = vpop.f32.mrb[0].mxu0
  %171 = vdwg.mxu0
  %v172 = vld [vmem:[%s1] sm:$0xff]
  %v173 = vld [vmem:[%s1 + $0x8] sm:$0xff]
  %v174 = vld [vmem:[%s1 + $0x10] sm:$0xff]
  %v175 = vld [vmem:[%s1 + $0x18] sm:$0xff]
  %v176 = vld [vmem:[%s1 + $0x20] sm:$0xff]
  %vm177 = vcmask 654336
  %v179 = vsel %vm177, %v172, 0
  %v182 = vsel %vm177, %v173, 0
  %v185 = vsel %vm177, %v174, 0
  %v188 = vsel %vm177, %v175, 0
  %v191 = vsel %vm177, %v176, 0
  %193 = vmatprep.subr.mxu0 0.0
  %194 = vmatpush1.msra.mxu0 %v124
  %195 = vmatprep.subr.mxu0 0.0
  %196 = vmatpush1.msra.mxu0 %v129
  %197 = vmatprep.subr.mxu0 0.0
  %198 = vmatpush1.msra.mxu0 %v134
  %199 = vmatprep.subr.mxu0 0.0
  %200 = vmatpush1.msra.mxu0 %v139
  %201 = vmatprep.subr.mxu0 0.0
  %202 = vmatpush1.msra.mxu0 %v144
  %203 = vmatprep.subr.mxu0 0.0
  %204 = vmatpush1.msra.mxu0 %v149
  %205 = vmatprep.subr.mxu0 0.0
  %206 = vmatpush1.msra.mxu0 %v154
  %207 = vmatprep.subr.mxu0 0.0
  %208 = vmatpush1.msra.mxu0 %v159
  %209 = vmatprep.subr.mxu0 0.0
  %210 = vmatpush1.msra.mxu0 %v164
  %211 = vmatprep.subr.mxu0 0.0
  %212 = vmatpush1.msra.mxu0 %v169
  %213 = vmatprep.subr.mxu0 0.0
  %214 = vmatpush1.msra.mxu0 0.0
  %215 = vmatprep.subr.mxu0 0.0
  %216 = vmatpush1.msra.mxu0 0.0
  %217 = vmatprep.subr.mxu0 0.0
  %218 = vmatpush1.msra.mxu0 0.0
  %219 = vmatprep.subr.mxu0 0.0
  %220 = vmatpush1.msra.mxu0 0.0
  %221 = vmatprep.subr.mxu0 0.0
  %222 = vmatpush1.msra.mxu0 0.0
  %223 = vmatprep.subr.mxu0 0.0
  %224 = vmatpush1.msra.mxu0 0.0
  %225 = vmatprep.subr.mxu0 0.0
  %226 = vmatpush1.msra.mxu0 0.0
  %227 = vmatprep.subr.mxu0 0.0
  %228 = vmatpush1.msra.mxu0 0.0
  %229 = vmatprep.subr.mxu0 0.0
  %230 = vmatpush1.msra.mxu0 0.0
  %231 = vmatprep.subr.mxu0 0.0
  %232 = vmatpush1.msra.mxu0 0.0
  %233 = vmatprep.subr.mxu0 0.0
  %234 = vmatpush1.msra.mxu0 0.0
  %235 = vmatprep.subr.mxu0 0.0
  %236 = vmatpush1.msra.mxu0 0.0
  %237 = vmatprep.subr.mxu0 0.0
  %238 = vmatpush1.msra.mxu0 0.0
  %239 = vmatprep.subr.mxu0 0.0
  %240 = vmatpush1.msra.mxu0 0.0
  %241 = vmatprep.subr.mxu0 0.0
  %242 = vmatpush1.msra.mxu0 0.0
  %243 = vmatprep.subr.mxu0 0.0
  %244 = vmatpush1.msra.mxu0 0.0
  %245 = vmatprep.subr.mxu0 0.0
  %246 = vmatpush1.msra.mxu0 0.0
  %247 = vmatprep.subr.mxu0 0.0
  %248 = vmatpush1.msra.mxu0 0.0
  %249 = vmatprep.subr.mxu0 0.0
  %250 = vmatpush1.msra.mxu0 0.0
  %251 = vmatprep.subr.mxu0 0.0
  %252 = vmatpush1.msra.mxu0 0.0
  %253 = vmatprep.subr.mxu0 0.0
  %254 = vmatpush1.msra.mxu0 0.0
  %255 = vmatprep.subr.mxu0 0.0
  %256 = vmatpush1.msra.mxu0 0.0
  %257 = vmatprep.mubr.f32.mxu0 0.0
  %258 = vmatmul.mubr.f32.gmra.mrb[0].mxu0 %v179
  %v259 = vpop.f32.mrb[0].mxu0
  %v260 = vadd.f32 0.0, %v259
  %v261 = vpop.f32.mrb[0].mxu0
  %262 = vmatprep.mubr.f32.mxu0 0.0
  %263 = vmatmul.mubr.f32.gmra.mrb[0].mxu0 %v182
  %v264 = vpop.f32.mrb[0].mxu0
  %v265 = vadd.f32 0.0, %v264
  %v266 = vpop.f32.mrb[0].mxu0
  %267 = vmatprep.mubr.f32.mxu0 0.0
  %268 = vmatmul.mubr.f32.gmra.mrb[0].mxu0 %v185
  %v269 = vpop.f32.mrb[0].mxu0
  %v270 = vadd.f32 0.0, %v269
  %v271 = vpop.f32.mrb[0].mxu0
  %272 = vmatprep.mubr.f32.mxu0 0.0
  %273 = vmatmul.mubr.f32.gmra.mrb[0].mxu0 %v188
  %v274 = vpop.f32.mrb[0].mxu0
  %v275 = vadd.f32 0.0, %v274
  %v276 = vpop.f32.mrb[0].mxu0
  %277 = vmatprep.mubr.f32.mxu0 0.0
  %278 = vmatmul.mubr.f32.gmra.mrb[0].mxu0 %v191
  %v279 = vpop.f32.mrb[0].mxu0
  %v280 = vadd.f32 0.0, %v279
  %v281 = vpop.f32.mrb[0].mxu0
  %282 = vdwg.mxu0
  %v283 = vmul.f32 %v260, %v260
  %v284 = vmul.f32 %v265, %v265
  %v285 = vmul.f32 %v260, %v265
  %v286 = vsub.f32 %v270, %v283
  %v287 = vsub.f32 %v275, %v284
  %v288 = vsub.f32 %v280, %v285
  %v289 = vmul.f32 %v285, 2.0
  %v290 = vadd.f32 %v289, 0.0001
  %v291 = vmul.f32 %v288, 2.0
  %v292 = vadd.f32 %v291, 0.0009
  %v293 = vmul.f32 %v290, %v292
  %v294 = vadd.f32 %v283, %v284
  %v295 = vadd.f32 %v294, 0.0001
  %v296 = vadd.f32 %v286, %v287
  %v297 = vadd.f32 %v296, 0.0009
  %v298 = vmul.f32 %v295, %v297
  %v299 = vrcp.pop %v298
  %v300 = vmul.f32 %v298, %v299
  %v301 = vsub.f32 2.0, %v300
  %v302 = vmul.f32 %v299, %v301
  %v303 = vmul.f32 %v293, %v302
  %v304 = vlaneseq
  %v305 = vshrl.u32 %v304, 7
  %v306 = vlaneseq
  %v307 = vand.u32 %v306, 127
  %vm308 = vcmp.lt.s32.totalorder %v305, 0
  %v309 = vsub.s32 0, %v305
  %v310 = vsel %vm308, %v309, %v305
  %v311 = vshrl.u32 %v310, 3
  %v312 = vand.u32 %v310, 7
  %v313 = vsub.s32 0, %v312
  %v314 = vsel %vm308, %v313, %v312
  %vm315 = vcmp.ne.s32.totalorder %v314, 0
  %vm316 = vcmp.lt.s32.totalorder %v314, 0
  %vm317 = vmand %vm316, %vm315
  %v318 = vadd.s32 %v314, 8
  %v319 = vsel %vm317, %v318, %v314
  %vm320 = vcmp.lt.s32.totalorder %v319, 6
  %vm321 = vcmp.lt.s32.totalorder %v307, 48
  %vm322 = vmand %vm320, %vm321
  %v323 = vsel %vm322, %v303, 0.0
  %324 = vadd.xlane.f32.xlu0 %v323
  %v325 = vpop.xlane.xlu0 %324
  %v326 = vrot.slane %v325, 4
  %v327 = vadd.f32 %v325, %v326
  %v328 = vrot.slane %v327, 2
  %v329 = vadd.f32 %v327, %v328
  %v330 = vrot.slane %v329, 1
  %v331 = vadd.f32 %v329, %v330
  %s332 = vtos %v331
  %vm333 = vcmp.eq.s32.totalorder %v307, 0
  %v334 = vstv %s34
  %v335 = vsel %vm333, %v334, 0.0
  %vm336 = vcmp.eq.s32.totalorder %v307, 1
  %v337 = vstv %s332
  %v338 = vsel %vm336, %v337, 0.0
  %v339 = vadd.f32 %v335, %v338
  %340 = vst [vmem:[%s4] sm:$0x1] %v339
  // Predicated region
  $region18: #{diffusion_loss.1} parent=0 // pred_check
    _
  $region19: #{diffusion_loss.1} parent=0 // pred_check_branch
    %342 = sbr.rel (0) target = $region21
  $region20: #{diffusion_loss.1} parent=0 // pred_region
    _
  $region21: #{diffusion_loss.1} parent=0 // pred_fallthru
    _
  // Predicated region
  $region22: #{diffusion_loss.1} parent=0 // pred_check
    _
  $region23: #{diffusion_loss.1} parent=0 // pred_check_branch
    %344 = sbr.rel (0) target = $region25
  $region24: #{diffusion_loss.1} parent=0 // pred_region
    _
  $region25: #{diffusion_loss.1} parent=0 // pred_fallthru
    _

</llo_original>
